<compile_context>
chip_gen: v6e
topology: v6e:2x2x1
jax: 0.10.0
libtpu: 0.0.40
codegen_flags: <defaults>
</compile_context>

<pallas_src>
import jax
import jax.numpy as jnp
from jax.experimental import pallas as pl
from jax.experimental.pallas import tpu as pltpu


def _round_up(a: int, m: int) -> int:
    return (a + m - 1) // m * m


def _cdiv(a: int, b: int) -> int:
    return (a + b - 1) // b


# ---------------- kernels ----------------

def _make_resident_kernel(matmul_dtype):
    def kernel(x_ref, w_ref, b_ref, o_ref):
        # x_ref: (TM, Hp)  w_ref: (Hp, Hp) resident  b_ref: (1, Hp)  o_ref: (TM, Hp)
        x = x_ref[...]
        xm = x if matmul_dtype is None else x.astype(matmul_dtype)
        y = jnp.dot(xm, w_ref[...], preferred_element_type=jnp.float32)
        y = y + b_ref[...].astype(jnp.float32)
        o_ref[...] = (x.astype(jnp.float32) + y).astype(o_ref.dtype)
    return kernel


def _make_ktiled_kernel(matmul_dtype):
    def kernel(x_ref, xres_ref, w_ref, b_ref, o_ref, acc_ref):
        # x_ref: (TM, TK) at (i, k); xres_ref: (TM, TN) at (i, j) (fetched once
        # per output tile since its index is constant across k); w_ref: (TK, TN)
        # at (k, j); b_ref: (1, TN); o_ref: (TM, TN); acc_ref: f32 scratch.
        k = pl.program_id(2)

        @pl.when(k == 0)
        def _init():
            acc_ref[...] = jnp.zeros_like(acc_ref)

        xm = x_ref[...] if matmul_dtype is None else x_ref[...].astype(matmul_dtype)
        acc_ref[...] += jnp.dot(xm, w_ref[...], preferred_element_type=jnp.float32)

        @pl.when(k == pl.num_programs(2) - 1)
        def _finalize():
            o_ref[...] = (acc_ref[...]
                          + b_ref[...].astype(jnp.float32)
                          + xres_ref[...].astype(jnp.float32)).astype(o_ref.dtype)
    return kernel


# ---------------- VMEM model ----------------

def _tpu_vmem_budget_and_cap():
    """Generation-aware (budget for tile selection, cap for vmem_limit_bytes)."""
    try:
        info = pltpu.get_tpu_info()
        phys = int(getattr(info, "vmem_capacity_bytes", 64 << 20))
    except Exception:
        phys = 64 << 20
    if phys >= (96 << 20):            # v5e / v6e: 128 MiB physical VMEM
        return (100 << 20), (120 << 20)
    return (48 << 20), (60 << 20)     # v7x: 64 MiB per TensorCore


def _vmem_need_resident(tm, hp, x_item, w_item, nbuf_x):
    return (nbuf_x * tm * hp * x_item     # streamed x row tiles
            + 2 * tm * hp * x_item        # output tiles (double-buffered)
            + 1 * hp * hp * w_item        # resident W, Buffered(1)
            + 1 * hp * w_item             # resident bias, Buffered(1)
            + 2 * tm * hp * 4)            # in-kernel f32 intermediates


def _vmem_need_ktiled(tm, tn, tk, x_item, w_item):
    return (2 * tm * tk * x_item          # x matmul block
            + 2 * tm * tn * x_item        # residual slice
            + 2 * tk * tn * w_item        # W block
            + 2 * tn * w_item             # bias slice
            + 2 * tm * tn * x_item        # output tile
            + 2 * tm * tn * 4)            # f32 accumulator + temps


def _pick_fallback_tiles(rp8, hp, x_item, w_item, budget):
    tn_cands = [t for t in (1024, 512, 256, 128) if hp % t == 0]
    tk_cands = tn_cands
    tm_cands = [t for t in (512, 256, 128, 64, 32, 16, 8) if t <= max(rp8, 8)]
    if not tm_cands:
        tm_cands = [8]
    for tm in tm_cands:
        for tn in tn_cands:
            for tk in tk_cands:
                if _vmem_need_ktiled(tm, tn, tk, x_item, w_item) <= budget:
                    return tm, tn, tk
    return tm_cands[-1], 128, 128


# ---------------- wrapper ----------------

def residual_linear(x, w, b, *, precision="highest"):
    """out = x + x @ w + b   (fused Residual(Linear)).

    x: (B, S, H), w: (H, H) stored (in, out), b: (H,).
    precision="bf16" opts into bf16 MXU inputs (f32 accumulation, f32
    bias/residual) for 2-4x matmul throughput; default is exact input dtype.
    """
    B, S, H = x.shape
    R = B * S
    orig_dtype = x.dtype

    use_bf16 = (precision == "bf16"
                and jnp.dtype(x.dtype) == jnp.float32
                and jnp.dtype(w.dtype) == jnp.float32)
    matmul_dtype = jnp.bfloat16 if use_bf16 else None

    # Lane-dense padding of the hidden/output dim only when needed.
    Hp = _round_up(H, 128)
    pad_h = Hp != H

    x2 = x.reshape(R, H)
    if pad_h:
        x2 = jnp.pad(x2, ((0, 0), (0, Hp - H)))
    w2 = jnp.pad(w, ((0, Hp - H), (0, Hp - H))) if pad_h else w
    if use_bf16:
        w2 = w2.astype(jnp.bfloat16)
    b2 = (jnp.pad(b, (0, Hp - H)) if pad_h else b).reshape(1, Hp)

    x_item = jnp.dtype(x2.dtype).itemsize
    w_item = jnp.dtype(w2.dtype).itemsize

    budget, vmem_cap = _tpu_vmem_budget_and_cap()

    rp8 = _round_up(R, 8)
    # Prefer big row tiles (512/1024) but keep >= ~8 grid steps so v7x's two
    # TensorCores and the pipeline have work; never force below 256 rows.
    tm_cap = max(256, _round_up(_cdiv(R, 8), 8))
    cand_tms = []
    for t in (1024, 512, 256, 128, 64, 32, 16, 8):
        t = min(t, rp8)
        if t <= tm_cap and t not in cand_tms:
            cand_tms.append(t)
    if not cand_tms:
        cand_tms = [min(256, rp8)]

    tm = None
    for t in cand_tms:
        if _vmem_need_resident(t, Hp, x_item, w_item, 2) <= budget:
            tm = t
            break

    if tm is not None:
        # ---------- resident-W path ----------
        n_row_tiles = _cdiv(R, tm)

        nbuf_x = 2
        if (n_row_tiles > 2 and Hp <= 1024
                and _vmem_need_resident(tm, Hp, x_item, w_item, 3) <= budget):
            nbuf_x = 3   # mem-bound small-H case: hide exposed x DMA

        need = _vmem_need_resident(tm, Hp, x_item, w_item, nbuf_x)
        vmem_limit = int(min(max(need + (8 << 20), 32 << 20), vmem_cap))

        x_kwargs = {} if nbuf_x == 2 else {"pipeline_mode": pl.Buffered(nbuf_x)}
        in_specs = [
            pl.BlockSpec((tm, Hp), lambda i: (i, 0), **x_kwargs),   # streamed x
            # Constant block index -> single buffer; frees ~Hp^2*w_item of VMEM.
            pl.BlockSpec((Hp, Hp), lambda i: (0, 0),
                         pipeline_mode=pl.Buffered(1)),              # resident W
            pl.BlockSpec((1, Hp), lambda i: (0, 0),
                         pipeline_mode=pl.Buffered(1)),              # resident bias
        ]
        out_specs = pl.BlockSpec((tm, Hp), lambda i: (i, 0))

        # Alias the padded x slab onto the output only when it is a freshly
        # materialized intermediate (never the caller's undonated buffer, which
        # would force a defensive copy).
        io_alias = {0: 0} if pad_h else {}

        bytes_accessed = (R * Hp * x_item + Hp * Hp * w_item
                          + Hp * w_item + R * Hp * x_item)
        cost = pl.CostEstimate(flops=2 * R * Hp * Hp + 2 * R * Hp,
                               transcendentals=0,
                               bytes_accessed=int(bytes_accessed))

        out = pl.pallas_call(
            _make_resident_kernel(matmul_dtype),
            out_shape=jax.ShapeDtypeStruct((R, Hp), orig_dtype),
            grid=(n_row_tiles,),
            in_specs=in_specs,
            out_specs=out_specs,
            input_output_aliases=io_alias,
            cost_estimate=cost,
            compiler_params=pltpu.CompilerParams(
                dimension_semantics=("parallel",),
                vmem_limit_bytes=vmem_limit,
            ),
        )(x2, w2, b2)
    else:
        # ---------- K-reduction fallback (W too large for VMEM residency) ----------
        tm, tn, tk = _pick_fallback_tiles(rp8, Hp, x_item, w_item, budget)
        need = _vmem_need_ktiled(tm, tn, tk, x_item, w_item)
        vmem_limit = int(min(max(need + (8 << 20), 32 << 20), vmem_cap))

        n_row_tiles = _cdiv(R, tm)
        n_j = Hp // tn
        n_k = Hp // tk

        in_specs = [
            pl.BlockSpec((tm, tk), lambda i, j, k: (i, k)),   # x matmul block
            pl.BlockSpec((tm, tn), lambda i, j, k: (i, j)),   # residual slice (1 fetch per out tile)
            pl.BlockSpec((tk, tn), lambda i, j, k: (k, j)),   # W block
            pl.BlockSpec((1, tn), lambda i, j, k: (0, j)),    # bias slice
        ]
        out_specs = pl.BlockSpec((tm, tn), lambda i, j, k: (i, j))

        bytes_accessed = (n_j * R * Hp * x_item              # x re-read once per j
                          + R * Hp * x_item                  # residual slices: one pass
                          + n_row_tiles * Hp * Hp * w_item   # W re-read per row tile
                          + Hp * w_item
                          + R * Hp * x_item)                 # output write
        cost = pl.CostEstimate(flops=2 * R * Hp * Hp + 2 * R * Hp,
                               transcendentals=0,
                               bytes_accessed=int(bytes_accessed))

        out = pl.pallas_call(
            _make_ktiled_kernel(matmul_dtype),
            out_shape=jax.ShapeDtypeStruct((R, Hp), orig_dtype),
            grid=(n_row_tiles, n_j, n_k),
            in_specs=in_specs,
            out_specs=out_specs,
            scratch_shapes=[pltpu.VMEM((tm, tn), jnp.float32)],
            cost_estimate=cost,
            compiler_params=pltpu.CompilerParams(
                dimension_semantics=("parallel", "parallel", "arbitrary"),
                vmem_limit_bytes=vmem_limit,
            ),
        )(x2, x2, w2, b2)

    if pad_h:
        out = out[:, :H]
    return out.reshape(B, S, H)


if __name__ == "__main__":
    batch, seq, hidden = 2, 8, 32

    key = jax.random.PRNGKey(0)
    kx, kw, kb = jax.random.split(key, 3)

    x = jax.random.normal(kx, (batch, seq, hidden), dtype=jnp.float32)
    # Deterministic "Linear(hidden, hidden)" params, stored as (in, out).
    bound = hidden ** -0.5
    w = jax.random.uniform(kw, (hidden, hidden), jnp.float32, -bound, bound)
    b = jax.random.uniform(kb, (hidden,), jnp.float32, -bound, bound)

    fn = jax.jit(residual_linear)
    out = jax.block_until_ready(fn(x, w, b))

    # Sanity check against a pure-JAX reference of x + layer(x).
    ref = x + (jnp.einsum("bsh,ho->bso", x, w) + b)
    assert out.shape == ref.shape
    assert jnp.allclose(out, ref, atol=1e-5, rtol=1e-5), "mismatch vs reference"

    print("KERNEL_OK")
</pallas_src>

<mosaic_0001>
module attributes {stable_mosaic.version = 11 : i64} {
  func.func @kernel(%arg0: i32, %arg1: memref<16x128xf32, #tpu.memory_space<vmem>>, %arg2: memref<128x128xf32, #tpu.memory_space<vmem>>, %arg3: memref<1x128xf32, #tpu.memory_space<vmem>>, %arg4: memref<16x128xf32, #tpu.memory_space<vmem>>) attributes {dimension_semantics = [#tpu.dimension_semantics<parallel>], iteration_bounds = array<i64: 1>, scalar_prefetch = 0 : i64, scratch_operands = 0 : i64, tpu.core_type = #tpu.core_type<tc>, window_params = [{transform_indices = @transform_0, window_bounds = array<i64: 16, 128>}, {pipeline_mode = #tpu.pipeline_mode<synchronous>, transform_indices = @transform_1, window_bounds = array<i64: 128, 128>}, {pipeline_mode = #tpu.pipeline_mode<synchronous>, transform_indices = @transform_2, window_bounds = array<i64: 1, 128>}, {transform_indices = @transform_3, window_bounds = array<i64: 16, 128>}]} {
    %c0 = arith.constant 0 : index
    %c0_0 = arith.constant 0 : index
    %0 = vector.load %arg1[%c0, %c0_0] : memref<16x128xf32, #tpu.memory_space<vmem>>, vector<16x128xf32>
    %c0_1 = arith.constant 0 : index
    %c0_2 = arith.constant 0 : index
    %1 = vector.load %arg2[%c0_1, %c0_2] : memref<128x128xf32, #tpu.memory_space<vmem>>, vector<128x128xf32>
    %cst = arith.constant dense<0.000000e+00> : vector<16x128xf32>
    %2 = tpu.matmul %0, %1, %cst {dimension_numbers = #tpu.dot_dimension_numbers<[1], [0], [0], [1], [0, 0, 1, 1], [], []>} : vector<16x128xf32>, vector<128x128xf32>, vector<16x128xf32> -> vector<16x128xf32>
    %c0_3 = arith.constant 0 : index
    %c0_4 = arith.constant 0 : index
    %3 = vector.load %arg3[%c0_3, %c0_4] : memref<1x128xf32, #tpu.memory_space<vmem>>, vector<1x128xf32>
    %4 = vector.broadcast %3 : vector<1x128xf32> to vector<16x128xf32>
    %5 = arith.addf %2, %4 : vector<16x128xf32>
    %6 = arith.addf %0, %5 : vector<16x128xf32>
    %c0_5 = arith.constant 0 : index
    %c0_6 = arith.constant 0 : index
    %7 = vector.load %arg4[%c0_5, %c0_6] : memref<16x128xf32, #tpu.memory_space<vmem>>, vector<16x128xf32>
    tpu.vector_store %arg4[%c0_5, %c0_6], %6 {strides = array<i32>} : memref<16x128xf32, #tpu.memory_space<vmem>>, vector<16x128xf32>,
    return
  }
  func.func @transform_0(%arg0: i32) -> (i32, i32) {
    %c0_i32 = arith.constant 0 : i32
    %c0_i32_0 = arith.constant 0 : i32
    return %arg0, %c0_i32 : i32, i32
  }
  func.func @transform_1(%arg0: i32) -> (i32, i32) {
    %c0_i32 = arith.constant 0 : i32
    %c0_i32_0 = arith.constant 0 : i32
    %c0_i32_1 = arith.constant 0 : i32
    return %c0_i32, %c0_i32_0 : i32, i32
  }
  func.func @transform_2(%arg0: i32) -> (i32, i32) {
    %c0_i32 = arith.constant 0 : i32
    %c0_i32_0 = arith.constant 0 : i32
    %c0_i32_1 = arith.constant 0 : i32
    return %c0_i32, %c0_i32_0 : i32, i32
  }
  func.func @transform_3(%arg0: i32) -> (i32, i32) {
    %c0_i32 = arith.constant 0 : i32
    %c0_i32_0 = arith.constant 0 : i32
    return %arg0, %c0_i32 : i32, i32
  }
}

</mosaic_0001>

<llo_original>
// kernel: residual_linear.1
$region0: #{residual_linear.1}
  #allocation0 [shape = 'u32[]', space=smem, size = 0x4, offset = 0x4, fixed_abs, tag = 'smem constant byte address 0x4 - core index']
  #allocation1 [shape = 'u32[144,128]{1,0:T(1,128)}', space=vmem, size = 0x12000, scoped, tag = 'internal scratch']
  %s0 = inlined_call_operand.vmem [shape: f32[16,128], index: 0, kind: input, shape index: {}, may-alias: {0,3}]
  %s1 = inlined_call_operand.vmem [shape: f32[128,128], index: 1, kind: input, shape index: {}]
  %s2 = inlined_call_operand.vmem [shape: f32[1,128], index: 2, kind: input, shape index: {}]
  %s3 = inlined_call_operand.vmem [shape: f32[16,128], index: 3, kind: output, shape index: {}, may-alias: {0,3}]
  %s4 = sld [smem:[#allocation0]]
  $region22: #{residual_linear.1} parent=0
    _
  %s6 = ssub.s32 1, %s4
  %s7 = scalar_select 0, %s6, %s4
  // Predicated region
  $region2: #{residual_linear.1} parent=0 // pred_check
    _
  $region3: #{residual_linear.1} parent=0 // pred_check_branch
    %9 = sbr.rel (0) target = $region5
  $region4: #{residual_linear.1} parent=0 // pred_region
    _
  $region5: #{residual_linear.1} parent=0 // pred_fallthru
    _
  // Predicated region
  $region6: #{residual_linear.1} parent=0 // pred_check
    _
  $region7: #{residual_linear.1} parent=0 // pred_check_branch
    %11 = sbr.rel (0) target = $region9
  $region8: #{residual_linear.1} parent=0 // pred_region
    _
  $region9: #{residual_linear.1} parent=0 // pred_fallthru
    _
  // Predicated region
  $region10: #{residual_linear.1} parent=0 // pred_check
    _
  $region11: #{residual_linear.1} parent=0 // pred_check_branch
    %13 = sbr.rel (0) target = $region13
  $region12: #{residual_linear.1} parent=0 // pred_region
    _
  $region13: #{residual_linear.1} parent=0 // pred_fallthru
    _
  %v14 = vld [vmem:[%s0] sm:$0xff]
  %v15 = vld [vmem:[%s0 + $0x8] sm:$0xff]
  %v16 = vld [vmem:[%s1] sm:$0xff]
  %v17 = vld [vmem:[%s1 + $0x8] sm:$0xff]
  %v18 = vld [vmem:[%s1 + $0x10] sm:$0xff]
  %v19 = vld [vmem:[%s1 + $0x18] sm:$0xff]
  %v20 = vld [vmem:[%s1 + $0x20] sm:$0xff]
  %v21 = vld [vmem:[%s1 + $0x28] sm:$0xff]
  %v22 = vld [vmem:[%s1 + $0x30] sm:$0xff]
  %v23 = vld [vmem:[%s1 + $0x38] sm:$0xff]
  %v24 = vld [vmem:[%s1 + $0x40] sm:$0xff]
  %v25 = vld [vmem:[%s1 + $0x48] sm:$0xff]
  %v26 = vld [vmem:[%s1 + $0x50] sm:$0xff]
  %v27 = vld [vmem:[%s1 + $0x58] sm:$0xff]
  %v28 = vld [vmem:[%s1 + $0x60] sm:$0xff]
  %v29 = vld [vmem:[%s1 + $0x68] sm:$0xff]
  %v30 = vld [vmem:[%s1 + $0x70] sm:$0xff]
  %v31 = vld [vmem:[%s1 + $0x78] sm:$0xff]
  %v32 = vld [vmem:[%s2] sm:$0x1]
  %v34 = vlaneseq
  %v35 = vshrl.u32 %v34, 7
  %v36 = vsub.s32 0, %v35
  %v37 = vrot.slane %v32, %v36
  %39 = vmatprep.subr.mxu0 0.0
  %40 = vmatpush1.msra.mxu0 %v31
  %41 = vmatprep.subr.mxu0 0.0
  %42 = vmatpush1.msra.mxu0 %v30
  %43 = vmatprep.subr.mxu0 0.0
  %44 = vmatpush1.msra.mxu0 %v29
  %45 = vmatprep.subr.mxu0 0.0
  %46 = vmatpush1.msra.mxu0 %v28
  %47 = vmatprep.subr.mxu0 0.0
  %48 = vmatpush1.msra.mxu0 %v27
  %49 = vmatprep.subr.mxu0 0.0
  %50 = vmatpush1.msra.mxu0 %v26
  %51 = vmatprep.subr.mxu0 0.0
  %52 = vmatpush1.msra.mxu0 %v25
  %53 = vmatprep.subr.mxu0 0.0
  %54 = vmatpush1.msra.mxu0 %v24
  %55 = vmatprep.subr.mxu0 0.0
  %56 = vmatpush1.msra.mxu0 %v23
  %57 = vmatprep.subr.mxu0 0.0
  %58 = vmatpush1.msra.mxu0 %v22
  %59 = vmatprep.subr.mxu0 0.0
  %60 = vmatpush1.msra.mxu0 %v21
  %61 = vmatprep.subr.mxu0 0.0
  %62 = vmatpush1.msra.mxu0 %v20
  %63 = vmatprep.subr.mxu0 0.0
  %64 = vmatpush1.msra.mxu0 %v19
  %65 = vmatprep.subr.mxu0 0.0
  %66 = vmatpush1.msra.mxu0 %v18
  %67 = vmatprep.subr.mxu0 0.0
  %68 = vmatpush1.msra.mxu0 %v17
  %69 = vmatprep.subr.mxu0 0.0
  %70 = vmatpush1.msra.mxu0 %v16
  %71 = vmatprep.subr.mxu0 0.0
  %72 = vmatpush2.msra.mxu0 0.0
  %73 = vmatprep.subr.mxu0 0.0
  %74 = vmatpush2.msra.mxu0 0.0
  %75 = vmatprep.subr.mxu0 0.0
  %76 = vmatpush2.msra.mxu0 0.0
  %77 = vmatprep.subr.mxu0 0.0
  %78 = vmatpush2.msra.mxu0 0.0
  %79 = vmatprep.subr.mxu0 0.0
  %80 = vmatpush2.msra.mxu0 0.0
  %81 = vmatprep.subr.mxu0 0.0
  %82 = vmatpush2.msra.mxu0 0.0
  %83 = vmatprep.subr.mxu0 0.0
  %84 = vmatpush2.msra.mxu0 0.0
  %85 = vmatprep.subr.mxu0 0.0
  %86 = vmatpush2.msra.mxu0 0.0
  %87 = vmatprep.subr.mxu0 0.0
  %88 = vmatpush2.msra.mxu0 0.0
  %89 = vmatprep.subr.mxu0 0.0
  %90 = vmatpush2.msra.mxu0 0.0
  %91 = vmatprep.subr.mxu0 0.0
  %92 = vmatpush2.msra.mxu0 0.0
  %93 = vmatprep.subr.mxu0 0.0
  %94 = vmatpush2.msra.mxu0 0.0
  %95 = vmatprep.subr.mxu0 0.0
  %96 = vmatpush2.msra.mxu0 0.0
  %97 = vmatprep.subr.mxu0 0.0
  %98 = vmatpush2.msra.mxu0 0.0
  %99 = vmatprep.subr.mxu0 0.0
  %100 = vmatpush2.msra.mxu0 0.0
  %101 = vmatprep.subr.mxu0 0.0
  %102 = vmatpush2.msra.mxu0 0.0
  %103 = vmatprep.mubr.f32.mxu0 0.0
  %104 = vmatmul.mubr.f32.gmra.mxu0 %v14
  %v105 = vpop.f32.mrf.mxu0
  %v106 = vadd.f32 %v37, %v105
  %v107 = vpop.f32.mrf.mxu0
  %108 = vmatprep.mubr.f32.mxu0 0.0
  %109 = vmatmul.mubr.f32.gmra.mxu0 %v15
  %v110 = vpop.f32.mrf.mxu0
  %v111 = vadd.f32 %v37, %v110
  %v112 = vpop.f32.mrf.mxu0
  %113 = vdwg.mxu0
  %v114 = vadd.f32 %v14, %v106
  %v115 = vadd.f32 %v15, %v111
  %116 = vst [vmem:[%s3] sm:$0xff] %v114
  %117 = vst [vmem:[%s3 + $0x8] sm:$0xff] %v115
  // Predicated region
  $region14: #{residual_linear.1} parent=0 // pred_check
    _
  $region15: #{residual_linear.1} parent=0 // pred_check_branch
    %119 = sbr.rel (0) target = $region17
  $region16: #{residual_linear.1} parent=0 // pred_region
    _
  $region17: #{residual_linear.1} parent=0 // pred_fallthru
    _
  // Predicated region
  $region18: #{residual_linear.1} parent=0 // pred_check
    _
  $region19: #{residual_linear.1} parent=0 // pred_check_branch
    %121 = sbr.rel (0) target = $region21
  $region20: #{residual_linear.1} parent=0 // pred_region
    _
  $region21: #{residual_linear.1} parent=0 // pred_fallthru
    _

</llo_original>
